<compile_context>
chip_gen: v7x
topology: tpu7x:2x2x1
jax: 0.10.0
libtpu: 0.0.40
codegen_flags: <defaults>
</compile_context>

<pallas_src>
import jax
import jax.numpy as jnp
from jax.experimental import pallas as pl
from jax.experimental.pallas import tpu as pltpu


def _round_up(x, m):
    return ((x + m - 1) // m) * m


def _cdiv(a, b):
    return -(-a // b)


def _tile_cap(M, d_model):
    """VMEM-budgeted cap on the M-tile size (trace-time Python ints only)."""
    lane_n = _round_up(d_model, 128)
    # Per output row, per grid step:
    #   out tile : 2 * lane_n * 4 bytes   (double-buffered, lane-padded)
    #   x tile   : 2 * 128 * 4 bytes      (d_inp lane-pads to 128 -> 32x inflation)
    #   temps    : ~3 * lane_n * 4 bytes  (unrolled outer-product intermediates)
    per_row = 4 * (5 * lane_n + 2 * 128)
    budget = 24 * 1024 * 1024  # leave headroom under the 32 MiB scoped limit below
    cap = min(4096, budget // per_row)
    cap = max(8, (cap // 8) * 8)
    if M > 8:
        # Guarantee grid >= 2 so v7x's two TensorCores both get work.
        cap = min(cap, max(8, _round_up(_cdiv(M, 2), 8)))
    return cap


def _largest_divisor_tile(M, cap):
    """Largest t <= cap with t % 8 == 0 and M % t == 0 (requires M % 8 == 0)."""
    t = (min(cap, M) // 8) * 8
    while t >= 8:
        if M % t == 0:
            return t
        t -= 8
    return 8


def _linear_nobias_kernel(x_ref, w_ref, o_ref):
    # x_ref: (TM, K)   w_ref: (K, N)   o_ref: (TM, N)
    # K is a tiny compile-time constant (4..6): an unrolled VPU outer-product
    # keeps full f32 precision and sidesteps the MXU for a ~3%-utilized
    # contraction.  The kernel stays HBM-write-bound.
    x = x_ref[...]
    w = w_ref[...]
    k_dim = x.shape[1]
    acc = x[:, 0:1] * w[0:1, :]
    for k in range(1, k_dim):  # static unroll
        acc = acc + x[:, k : k + 1] * w[k : k + 1, :]
    o_ref[...] = acc.astype(o_ref.dtype)


def time_feature_embedding(x, weight):
    """Pallas equivalent of nn.Linear(d_inp, d_model, bias=False).

    Args:
      x:      [B, L, d_inp] float32
      weight: [d_model, d_inp] float32  (PyTorch nn.Linear weight layout)

    Returns:
      [B, L, d_model] float32  ( == x @ weight.T )
    """
    B, L, d_inp = x.shape
    d_model = weight.shape[0]
    M = B * L

    x2d = x.reshape(M, d_inp)          # free: contiguous view-compatible reshape
    w_t = weight.T                     # (d_inp, d_model), tiny

    cap = _tile_cap(M, d_model)

    if M % 8 == 0:
        TM = _largest_divisor_tile(M, cap)   # divides M -> no pad, no slice
        M_pad = M
    elif M <= cap:
        TM = M                               # single full block (block == full dim)
        M_pad = M
    else:
        # Rare fallback (large, non-multiple-of-8 M): pad rows up to a multiple
        # of 8 and slice them back off afterwards.
        M_pad = _round_up(M, 8)
        TM = _largest_divisor_tile(M_pad, cap)
        x2d = jnp.pad(x2d, ((0, M_pad - M), (0, 0)))

    grid = (M_pad // TM,)

    cost = pl.CostEstimate(
        flops=2 * M * d_inp * d_model,
        transcendentals=0,
        bytes_accessed=4 * (M * d_inp + M * d_model + d_inp * d_model),
    )

    out2d = pl.pallas_call(
        _linear_nobias_kernel,
        out_shape=jax.ShapeDtypeStruct((M_pad, d_model), x.dtype),
        grid=grid,
        in_specs=[
            # x row-tile marches down the M axis.
            pl.BlockSpec((TM, d_inp), lambda i: (i, 0)),
            # weight: constant index_map -> DMA'd once, resident in VMEM.
            pl.BlockSpec((d_inp, d_model), lambda i: (0, 0)),
        ],
        # True output width: no N padding, no post-kernel slice pass.
        out_specs=pl.BlockSpec((TM, d_model), lambda i: (i, 0)),
        compiler_params=pltpu.CompilerParams(
            # Disjoint output row-tiles per step -> parallel axis (v7x megacore).
            dimension_semantics=("parallel",),
            vmem_limit_bytes=32 * 1024 * 1024,
        ),
        cost_estimate=cost,
    )(x2d, w_t)

    if M_pad != M:
        out2d = out2d[:M]
    return out2d.reshape(B, L, d_model)


def reference(x, weight):
    # Pure-JAX reference of the PyTorch fp32 forward: x @ W^T.
    # HIGHEST precision so the reference matches the kernel's fp32 VPU path.
    return jnp.einsum(
        "bld,md->blm", x, weight, precision=jax.lax.Precision.HIGHEST
    )


if __name__ == "__main__":
    # freq='h' -> d_inp = 4; small d_model for the test.
    B, L, d_inp, d_model = 2, 8, 4, 32

    key = jax.random.PRNGKey(0)
    kx, kw = jax.random.split(key)

    x = jax.random.normal(kx, (B, L, d_inp), dtype=jnp.float32)
    # Deterministic init of the Linear weight (shape [d_model, d_inp] as in PyTorch).
    weight = jax.random.normal(kw, (d_model, d_inp), dtype=jnp.float32) * 0.1

    out = time_feature_embedding(x, weight)
    out = jax.block_until_ready(out)

    ref = reference(x, weight)
    assert out.shape == (B, L, d_model)
    assert jnp.allclose(out, ref, atol=1e-5, rtol=1e-5)

    print("KERNEL_OK")
</pallas_src>

<mosaic_0001>
module attributes {stable_mosaic.version = 11 : i64} {
  func.func @_linear_nobias_kernel(%arg0: i32, %arg1: memref<8x4xf32, #tpu.memory_space<vmem>>, %arg2: memref<4x32xf32, #tpu.memory_space<vmem>>, %arg3: memref<8x32xf32, #tpu.memory_space<vmem>>) attributes {dimension_semantics = [#tpu.dimension_semantics<parallel>], iteration_bounds = array<i64: 2>, scalar_prefetch = 0 : i64, scratch_operands = 0 : i64, tpu.core_type = #tpu.core_type<tc>, window_params = [{transform_indices = @transform_0, window_bounds = array<i64: 8, 4>}, {pipeline_mode = #tpu.pipeline_mode<synchronous>, transform_indices = @transform_1, window_bounds = array<i64: 4, 32>}, {transform_indices = @transform_2, window_bounds = array<i64: 8, 32>}]} {
    %c0 = arith.constant 0 : index
    %c0_0 = arith.constant 0 : index
    %0 = vector.load %arg1[%c0, %c0_0] : memref<8x4xf32, #tpu.memory_space<vmem>>, vector<8x4xf32>
    %c0_1 = arith.constant 0 : index
    %c0_2 = arith.constant 0 : index
    %1 = vector.load %arg2[%c0_1, %c0_2] : memref<4x32xf32, #tpu.memory_space<vmem>>, vector<4x32xf32>
    %2 = vector.extract_strided_slice %0 {offsets = [0, 0], sizes = [8, 1], strides = [1, 1]} : vector<8x4xf32> to vector<8x1xf32>
    %3 = vector.extract_strided_slice %1 {offsets = [0, 0], sizes = [1, 32], strides = [1, 1]} : vector<4x32xf32> to vector<1x32xf32>
    %4 = vector.broadcast %2 : vector<8x1xf32> to vector<8x32xf32>
    %5 = vector.broadcast %3 : vector<1x32xf32> to vector<8x32xf32>
    %6 = arith.mulf %4, %5 : vector<8x32xf32>
    %7 = vector.extract_strided_slice %0 {offsets = [0, 1], sizes = [8, 1], strides = [1, 1]} : vector<8x4xf32> to vector<8x1xf32>
    %8 = vector.extract_strided_slice %1 {offsets = [1, 0], sizes = [1, 32], strides = [1, 1]} : vector<4x32xf32> to vector<1x32xf32>
    %9 = vector.broadcast %7 : vector<8x1xf32> to vector<8x32xf32>
    %10 = vector.broadcast %8 : vector<1x32xf32> to vector<8x32xf32>
    %11 = arith.mulf %9, %10 : vector<8x32xf32>
    %12 = arith.addf %6, %11 : vector<8x32xf32>
    %13 = vector.extract_strided_slice %0 {offsets = [0, 2], sizes = [8, 1], strides = [1, 1]} : vector<8x4xf32> to vector<8x1xf32>
    %14 = vector.extract_strided_slice %1 {offsets = [2, 0], sizes = [1, 32], strides = [1, 1]} : vector<4x32xf32> to vector<1x32xf32>
    %15 = vector.broadcast %13 : vector<8x1xf32> to vector<8x32xf32>
    %16 = vector.broadcast %14 : vector<1x32xf32> to vector<8x32xf32>
    %17 = arith.mulf %15, %16 : vector<8x32xf32>
    %18 = arith.addf %12, %17 : vector<8x32xf32>
    %19 = vector.extract_strided_slice %0 {offsets = [0, 3], sizes = [8, 1], strides = [1, 1]} : vector<8x4xf32> to vector<8x1xf32>
    %20 = vector.extract_strided_slice %1 {offsets = [3, 0], sizes = [1, 32], strides = [1, 1]} : vector<4x32xf32> to vector<1x32xf32>
    %21 = vector.broadcast %19 : vector<8x1xf32> to vector<8x32xf32>
    %22 = vector.broadcast %20 : vector<1x32xf32> to vector<8x32xf32>
    %23 = arith.mulf %21, %22 : vector<8x32xf32>
    %24 = arith.addf %18, %23 : vector<8x32xf32>
    %c0_3 = arith.constant 0 : index
    %c0_4 = arith.constant 0 : index
    %25 = vector.load %arg3[%c0_3, %c0_4] : memref<8x32xf32, #tpu.memory_space<vmem>>, vector<8x32xf32>
    tpu.vector_store %arg3[%c0_3, %c0_4], %24 {strides = array<i32>} : memref<8x32xf32, #tpu.memory_space<vmem>>, vector<8x32xf32>,
    return
  }
  func.func @transform_0(%arg0: i32) -> (i32, i32) {
    %c0_i32 = arith.constant 0 : i32
    %c0_i32_0 = arith.constant 0 : i32
    return %arg0, %c0_i32 : i32, i32
  }
  func.func @transform_1(%arg0: i32) -> (i32, i32) {
    %c0_i32 = arith.constant 0 : i32
    %c0_i32_0 = arith.constant 0 : i32
    %c0_i32_1 = arith.constant 0 : i32
    return %c0_i32, %c0_i32_0 : i32, i32
  }
  func.func @transform_2(%arg0: i32) -> (i32, i32) {
    %c0_i32 = arith.constant 0 : i32
    %c0_i32_0 = arith.constant 0 : i32
    return %arg0, %c0_i32 : i32, i32
  }
}

</mosaic_0001>

<llo_original>
// kernel: tpu_custom_call.1
$region0: #{tpu_custom_call.1}
  #allocation0 [shape = 'u32[]', space=smem, size = 0x4, offset = 0x4, fixed_abs, tag = 'smem constant byte address 0x4 - core index']
  #allocation1 [shape = 'u32[144,128]{1,0:T(1,128)}', space=vmem, size = 0x12000, scoped, tag = 'internal scratch']
  %s0 = inlined_call_operand.vmem [shape: f32[16,4], index: 0, kind: input, shape index: {}]
  %s1 = inlined_call_operand.vmem [shape: f32[4,32], index: 1, kind: input, shape index: {}]
  %s2 = inlined_call_operand.hbm [shape: f32[16,32], index: 2, kind: output, shape index: {}]
  %s3 = sld [smem:[#allocation0]]
  $region41: #{tpu_custom_call.1} parent=0
    _
  %s5 = ssub.s32 1, %s3
  %s6 = scalar_select 0, %s5, %s3
  $region1: #{tpu_custom_call.1} parent=0
    #allocation2 [shape = 'u8[8192]{0}', space=vmem, size = 0x2000, scoped, tag = 'output window, operand 0']
    #allocation3 [shape = 's32[2]{0}', space=sflag, size = 0x8, scoped, tag = 'scoped memory for tpu_custom_call.1']
    %7 = vsyncpa [#allocation3], 0
    %s8 = scalar_lea.sflag [#allocation3], 1
    %9 = vsyncpa %s8, 0
    loop: start=0, step=1, limit=4
    $region2: #{tpu_custom_call.1} parent=1 // loop_pre_header
      _
    $region3: #{tpu_custom_call.1} parent=1 // loop_header
      %s11 = sphi 0, %s15
      %p12 = scmp.ge.s32.totalorder %s11, 4
      %s21 = sphi 0, %s23
      %s24 = sphi 0, %s21
      %s25 = sphi 0, %s24
      %s41 = sphi 0, %s25
      %s45 = sphi 0, %s45
      %s47 = sphi 0, %s45
      %s48 = sphi 0, %s47
      %s62 = sphi 0, %s48
      %s68 = sphi 0, %s70
      %s71 = sphi 0, %s68
      %s72 = sphi 0, %s71
      %s88 = sphi 0, %s72
    $region4: #{tpu_custom_call.1} parent=1 // loop_header_branch
      %14 = sbr.rel (%p12) target = $region8
    $region5: #{tpu_custom_call.1} parent=1 // loop_body
      %s16 = ssub.s32 %s11, 1
      %s17 = ssub.s32 %s11, 2
      %s18 = sadd.s32 %s11, 1
      %s19 = ssub.s32 %s11, %s18
      %p20 = scmp.eq.s32.totalorder %s19, 0
      %s22 = sadd.s32 %s21, 1
      %s23 = scalar_select %p20, %s21, %s22
      %p26 = pneg %p20
      %p27 = scmp.eq.s32.totalorder %s11, 1
      %p28 = por %p26, %p27
      %p29 = scmp.ne.s32.totalorder %s21, %s24
      %p30 = scmp.eq.s32.totalorder %s11, 0
      %p31 = por %p29, %p30
      %p32 = scmp.ne.s32.totalorder %s21, %s24
      %p33 = scmp.eq.s32.totalorder %s16, 1
      %p34 = por %p32, %p33
      %p35 = scmp.ne.s32.totalorder %s24, %s25
      %p36 = scmp.eq.s32.totalorder %s16, 0
      %p37 = por %p35, %p36
      %p38 = scmp.ne.s32.totalorder %s24, %s25
      %p39 = scmp.eq.s32.totalorder %s17, 1
      %p40 = por %p38, %p39
      %p42 = scmp.ne.s32.totalorder %s25, %s41
      %p43 = scmp.eq.s32.totalorder %s17, 0
      %p44 = por %p42, %p43
      %s46 = sadd.s32 %s45, 1
      %p49 = scmp.eq.s32.totalorder %s11, 1
      %p50 = scmp.ne.s32.totalorder %s45, %s47
      %p51 = scmp.eq.s32.totalorder %s11, 0
      %p52 = por %p50, %p51
      %p53 = scmp.ne.s32.totalorder %s45, %s47
      %p54 = scmp.eq.s32.totalorder %s16, 1
      %p55 = por %p53, %p54
      %p56 = scmp.ne.s32.totalorder %s47, %s48
      %p57 = scmp.eq.s32.totalorder %s16, 0
      %p58 = por %p56, %p57
      %p59 = scmp.ne.s32.totalorder %s47, %s48
      %p60 = scmp.eq.s32.totalorder %s17, 1
      %p61 = por %p59, %p60
      %p63 = scmp.ne.s32.totalorder %s48, %s62
      %p64 = scmp.eq.s32.totalorder %s17, 0
      %p65 = por %p63, %p64
      %s66 = ssub.s32 %s11, %s18
      %p67 = scmp.eq.s32.totalorder %s66, 0
      %s69 = sadd.s32 %s68, 1
      %s70 = scalar_select %p67, %s68, %s69
      %p73 = pneg %p67
      %p74 = scmp.eq.s32.totalorder %s11, 1
      %p75 = por %p73, %p74
      %p76 = scmp.ne.s32.totalorder %s68, %s71
      %p77 = scmp.eq.s32.totalorder %s11, 0
      %p78 = por %p76, %p77
      %p79 = scmp.ne.s32.totalorder %s68, %s71
      %p80 = scmp.eq.s32.totalorder %s16, 1
      %p81 = por %p79, %p80
      %p82 = scmp.ne.s32.totalorder %s71, %s72
      %p83 = scmp.eq.s32.totalorder %s16, 0
      %p84 = por %p82, %p83
      %p85 = scmp.ne.s32.totalorder %s71, %s72
      %p86 = scmp.eq.s32.totalorder %s17, 1
      %p87 = por %p85, %p86
      %p89 = scmp.ne.s32.totalorder %s72, %s88
      %p90 = scmp.eq.s32.totalorder %s17, 0
      %p91 = por %p89, %p90
      %p92 = scmp.le.s32.totalorder 1, %s11
      %p93 = scmp.lt.s32.totalorder %s11, 3
      %p94 = pnand %p92, %p93
      %p95 = pneg %p94
      // Predicated region
      $region9: #{tpu_custom_call.1} parent=5 // pred_check
        _
      $region10: #{tpu_custom_call.1} parent=5 // pred_check_branch
        %97 = sbr.rel (%p94) target = $region12
      $region11: #{tpu_custom_call.1} parent=5 // pred_region
        %s98 = ssub.s32 %s11, 1
        // Predicated region
        $region13: #{tpu_custom_call.1} parent=11 // pred_check
          %p99 = pneg %p58
        $region14: #{tpu_custom_call.1} parent=11 // pred_check_branch
          %101 = sbr.rel (%p99) target = $region16
        $region15: #{tpu_custom_call.1} parent=11 // pred_region
          _
        $region16: #{tpu_custom_call.1} parent=11 // pred_fallthru
          _
      $region12: #{tpu_custom_call.1} parent=5 // pred_fallthru
        _
      %p102 = scmp.lt.s32.totalorder %s11, 2
      // Predicated region
      $region17: #{tpu_custom_call.1} parent=5 // pred_check
        %p103 = pneg %p102
      $region18: #{tpu_custom_call.1} parent=5 // pred_check_branch
        %105 = sbr.rel (%p103) target = $region20
      $region19: #{tpu_custom_call.1} parent=5 // pred_region
        // Predicated region
        $region21: #{tpu_custom_call.1} parent=19 // pred_check
          %p106 = pneg %p31
        $region22: #{tpu_custom_call.1} parent=19 // pred_check_branch
          %108 = sbr.rel (%p106) target = $region24
        $region23: #{tpu_custom_call.1} parent=19 // pred_region
          %p109 = scmp.lt.s32.totalorder %s11, 1
          %s110 = scalar_select %p109, %s11, 1
          %s111 = smul.addr %s110, 8
          %s112 = scalar_lea.vmem %s0, %s111
        $region24: #{tpu_custom_call.1} parent=19 // pred_fallthru
          _
      $region20: #{tpu_custom_call.1} parent=5 // pred_fallthru
        _
      %p113 = scmp.le.s32.totalorder 1, %s11
      %p114 = scmp.lt.s32.totalorder %s11, 3
      %p115 = pnand %p113, %p114
      %p116 = pneg %p115
      // Predicated region
      $region25: #{tpu_custom_call.1} parent=5 // pred_check
        _
      $region26: #{tpu_custom_call.1} parent=5 // pred_check_branch
        %118 = sbr.rel (%p115) target = $region28
      $region27: #{tpu_custom_call.1} parent=5 // pred_region
        %s119 = ssub.s32 %s11, 1
        %p120 = scmp.lt.s32.totalorder %s16, 1
        %s121 = scalar_select %p120, %s16, 1
        %s122 = smul.addr %s121, 8
        %s123 = scalar_lea.vmem %s0, %s122
        %p124 = pneg %p37
        %p125 = pneg %p34
        %p126 = pneg %p58
        %p127 = pneg %p55
        %p128 = pneg %p84
        %p129 = pneg %p81
        %s130 = sand.u32 %s71, 1
        %s131 = scalar_lea.sflag [#allocation3], %s130
        %s132 = sand.u32 %s71, 1
        %s133 = smul.addr %s132, 8
        %s134 = scalar_lea.vmem [#allocation2], %s133
        %p135 = scmp.lt.s32.totalorder %s16, 1
        %s136 = scalar_select %p135, %s16, 1
        %s137 = smul.addr %s136, 8
        %s138 = scalar_lea.vmem %s0, %s137
        %v139 = vld [vmem:[%s138] sm:$0xff]
        %v140 = vld [vmem:[%s1] sm:$0xf]
        %142 = vset.pattern.permute.xlu0 0
        %143 = vperm.xlu0 %142, %v139
        %v144 = vpop.permute.xlu0 %143
        %v146 = vlaneseq
        %v147 = vshrl.u32 %v146, 7
        %v148 = vsub.s32 0, %v147
        %v149 = vrot.slane %v140, %v148
        %v150 = vmul.f32 %v144, %v149
        %151 = vset.pattern.permute.xlu0 1
        %152 = vperm.xlu0 %151, %v139
        %v153 = vpop.permute.xlu0 %152
        %v155 = vlaneseq
        %v156 = vshrl.u32 %v155, 7
        %v157 = vsub.s32 1, %v156
        %v158 = vrot.slane %v140, %v157
        %v159 = vmul.f32 %v153, %v158
        %v160 = vadd.f32 %v150, %v159
        %161 = vset.pattern.permute.xlu0 2
        %162 = vperm.xlu0 %161, %v139
        %v163 = vpop.permute.xlu0 %162
        %v165 = vlaneseq
        %v166 = vshrl.u32 %v165, 7
        %v167 = vsub.s32 2, %v166
        %v168 = vrot.slane %v140, %v167
        %v169 = vmul.f32 %v163, %v168
        %v170 = vadd.f32 %v160, %v169
        %171 = vset.pattern.permute.xlu0 3
        %172 = vperm.xlu0 %171, %v139
        %v173 = vpop.permute.xlu0 %172
        %v175 = vlaneseq
        %v176 = vshrl.u32 %v175, 7
        %v177 = vsub.s32 3, %v176
        %v178 = vrot.slane %v140, %v177
        %v179 = vmul.f32 %v173, %v178
        %v180 = vadd.f32 %v170, %v179
        %vm181 = vcmask 261120
        %182 = vst.msk [vmem:[%s134] sm:$0xff] %vm181, %v180
        %s183 = sand.u32 %s71, 1
        %s184 = scalar_lea.sflag [#allocation3], %s183
        %s185 = sand.u32 %s71, 1
        %s186 = smul.addr %s185, 8
        %s187 = scalar_lea.vmem [#allocation2], %s186
        // Predicated region
        $region29: #{tpu_custom_call.1} parent=27 // pred_check
          %p188 = pneg %p81
        $region30: #{tpu_custom_call.1} parent=27 // pred_check_branch
          %190 = sbr.rel (%p188) target = $region32
        $region31: #{tpu_custom_call.1} parent=27 // pred_region
          %s192 = ssub.s32 128, 128
          %193 = vsyncadd %s184, %s192
          %s194 = smul.addr %s16, 128
          %s195 = scalar_lea.hbm %s2, %s194
          %s197 = sshll.u32 %s187, 4
          %s198 = int_to_ptr.vmem [resolvable:$true] %s197
          %200 = dma.vmem_to_hbm [thread:$0]  %s198, 128, %s195, %s184
        $region32: #{tpu_custom_call.1} parent=27 // pred_fallthru
          _
      $region28: #{tpu_custom_call.1} parent=5 // pred_fallthru
        _
      %p201 = scmp.le.s32.totalorder 2, %s11
      // Predicated region
      $region33: #{tpu_custom_call.1} parent=5 // pred_check
        %p202 = pneg %p201
      $region34: #{tpu_custom_call.1} parent=5 // pred_check_branch
        %204 = sbr.rel (%p202) target = $region36
      $region35: #{tpu_custom_call.1} parent=5 // pred_region
        %s205 = ssub.s32 %s11, 2
        // Predicated region
        $region37: #{tpu_custom_call.1} parent=35 // pred_check
          %p206 = pneg %p87
        $region38: #{tpu_custom_call.1} parent=35 // pred_check_branch
          %208 = sbr.rel (%p206) target = $region40
        $region39: #{tpu_custom_call.1} parent=35 // pred_region
          %s209 = sand.u32 %s72, 1
          %s210 = scalar_lea.sflag [#allocation3], %s209
          %s211 = sand.u32 %s72, 1
          %s212 = smul.addr %s211, 8
          %s213 = scalar_lea.vmem [#allocation2], %s212
          %214 = dma.done %s210, 128
        $region40: #{tpu_custom_call.1} parent=35 // pred_fallthru
          _
      $region36: #{tpu_custom_call.1} parent=5 // pred_fallthru
        _
    $region6: #{tpu_custom_call.1} parent=1 // loop_footer
      %s15 = sadd.s32 1, %s11
    $region7: #{tpu_custom_call.1} parent=1 // loop_footer_branch
      %10 = sbr.rel target = $region3
    $region8: #{tpu_custom_call.1} parent=1 // loop_exit
      _
    %215 = vsyncpa [#allocation3], 1
    %s216 = scalar_lea.sflag [#allocation3], 1
    %217 = vsyncpa %s216, 1

</llo_original>
